<compile_context>
chip_gen: v5e
topology: v5e:2x2
jax: 0.10.0
libtpu: 0.0.40
codegen_flags: <defaults>
</compile_context>

<pallas_src>
import functools

import jax
import jax.numpy as jnp
from jax.experimental import pallas as pl
from jax.experimental.pallas import tpu as pltpu


# ----------------------------- Pallas kernel --------------------------------

def moe_kernel(x_ref,
               fw_ref, fb_ref,          # fused [experts | gate] weight / bias
               mix_ref,                 # (NE, NE*ED) 0/1 gate-expansion matrix
               ow_ref, ob_ref,          # tiled output projection (NE*ED, Opad)
               o_ref,
               *, num_experts, expert_dim):
    """Dense MoE for one (block_rows, input_dim) tile of rows."""
    ne, ed = num_experts, expert_dim
    cdt = fw_ref.dtype                                   # MXU operand dtype

    x = x_ref[...].astype(cdt)                           # (TB, I)

    # --- one MXU pass over x: all experts + gate logits ---------------------
    fused = jnp.dot(x, fw_ref[...],
                    preferred_element_type=jnp.float32) + fb_ref[...]  # (TB, NE*ED+NE)
    eo = fused[:, : ne * ed]                             # (TB, NE*ED)  expert outs
    logits = fused[:, ne * ed:]                          # (TB, NE)     gate logits

    # --- softmax over experts (f32 elementwise, EUP reciprocal) -------------
    logits = logits - jnp.max(logits, axis=-1, keepdims=True)
    p = jnp.exp(logits)
    denom = jnp.sum(p, axis=-1, keepdims=True)
    r = pl.reciprocal(denom, approx=True)
    r = r * (2.0 - denom * r)                            # Newton step -> ~f32 exact
    gate = p * r                                         # (TB, NE)

    # --- gate-weighted mixture folded into the output projection ------------
    # gate_rep[:, e*ED:(e+1)*ED] = gate[:, e]  via a tiny 0/1 matmul (MXU).
    gate_rep = jnp.dot(gate.astype(cdt), mix_ref[...],
                       preferred_element_type=jnp.float32)             # (TB, NE*ED)
    weighted = (gate_rep * eo).astype(cdt)                              # (TB, NE*ED)

    # K = NE*ED (=256 here) output matmul; bias add stays f32.
    y = jnp.dot(weighted, ow_ref[...],
                preferred_element_type=jnp.float32) + ob_ref[...]       # (TB, Opad)
    o_ref[...] = y.astype(o_ref.dtype)


# ------------------------------ wrapper --------------------------------------

def moe_pallas(x, packed, *, block_rows=None):
    """x: (B, input_dim).  packed: output of pack_params()."""
    B, I = x.shape
    NE, ED, O = packed["num_experts"], packed["expert_dim"], packed["out_dim"]
    Opad = packed["out_w"].shape[1]

    if block_rows is None:
        block_rows = min(256, B)
        if block_rows == B and B >= 16:
            block_rows = B // 2          # keep >= 2 parallel steps (v7x dual TC)
    assert B % block_rows == 0, "batch must be divisible by block_rows"

    fw, fb = packed["fused_w"], packed["fused_b"]
    mw = packed["mix_w"]
    ow, ob = packed["out_w"], packed["out_b"]

    const = lambda shape: pl.BlockSpec(shape, lambda i: (0, 0))
    kernel = functools.partial(moe_kernel, num_experts=NE, expert_dim=ED)

    out = pl.pallas_call(
        kernel,
        out_shape=jax.ShapeDtypeStruct((B, Opad), x.dtype),
        grid=(B // block_rows,),
        in_specs=[
            pl.BlockSpec((block_rows, I), lambda i: (i, 0)),   # x rows
            const(fw.shape), const(fb.shape),                  # fused experts+gate
            const(mw.shape),                                    # gate expansion
            const(ow.shape), const(ob.shape),                  # output projection
        ],
        out_specs=pl.BlockSpec((block_rows, Opad), lambda i: (i, 0)),
        compiler_params=pltpu.CompilerParams(
            dimension_semantics=("parallel",)),
    )(x, fw, fb, mw, ow, ob)

    return out[:, :O]                     # drop lane padding


# ------------------------- parameter packing ---------------------------------

def pack_params(p, *, mxu_dtype=jnp.float32):
    """One-time prep: transpose to x@W form, fuse gate into the stacked expert
    weight, tile the output projection to K=NE*ED, pad O to 128 lanes."""
    NE, ED, I = p["expert_w"].shape
    O = p["out_w"].shape[0]
    Opad = ((O + 127) // 128) * 128

    expert_w = jnp.transpose(p["expert_w"], (2, 0, 1)).reshape(I, NE * ED)
    fused_w = jnp.concatenate([expert_w, p["gate_w"].T], axis=1)        # (I, NE*ED+NE)
    fused_b = jnp.concatenate([p["expert_b"].reshape(1, -1),
                               p["gate_b"].reshape(1, -1)], axis=1)     # (1, NE*ED+NE)

    mix_w = jnp.repeat(jnp.eye(NE, dtype=jnp.float32), ED, axis=1)      # (NE, NE*ED)

    ow = jnp.tile(p["out_w"].T, (NE, 1))                                # (NE*ED, O)
    ow = jnp.pad(ow, ((0, 0), (0, Opad - O)))
    ob = jnp.pad(p["out_b"].reshape(1, -1), ((0, 0), (0, Opad - O)))

    return {
        "fused_w": fused_w.astype(mxu_dtype),
        "fused_b": fused_b.astype(jnp.float32),   # bias adds stay f32 (v5e VPU)
        "mix_w":   mix_w.astype(mxu_dtype),
        "out_w":   ow.astype(mxu_dtype),
        "out_b":   ob.astype(jnp.float32),
        "num_experts": NE, "expert_dim": ED, "out_dim": O,
    }


# ------------------------- pure-JAX reference ---------------------------------

def moe_ref(x, p):
    """Mirrors the PyTorch MoELayer.forward (weights in nn.Linear layout)."""
    gate = jax.nn.softmax(x @ p["gate_w"].T + p["gate_b"], axis=-1)          # (B, NE)
    outs = jnp.einsum("bi,ndi->bnd", x, p["expert_w"]) + p["expert_b"]       # (B, NE, ED)
    mixed = jnp.sum(gate[:, :, None] * outs, axis=1)                          # (B, ED)
    return mixed @ p["out_w"].T + p["out_b"]                                  # (B, O)


# ------------------------------- params ---------------------------------------

def init_params(key, input_dim, num_experts, expert_dim, output_dim):
    ks = jax.random.split(key, 6)
    f32 = jnp.float32
    return {
        # PyTorch nn.Linear layout: weight (out_features, in_features)
        "gate_w":   (0.1 * jax.random.normal(ks[0], (num_experts, input_dim))).astype(f32),
        "gate_b":   (0.05 * jax.random.normal(ks[1], (num_experts,))).astype(f32),
        "expert_w": (0.1 * jax.random.normal(ks[2], (num_experts, expert_dim, input_dim))).astype(f32),
        "expert_b": (0.05 * jax.random.normal(ks[3], (num_experts, expert_dim))).astype(f32),
        "out_w":    (0.1 * jax.random.normal(ks[4], (output_dim, expert_dim))).astype(f32),
        "out_b":    (0.05 * jax.random.normal(ks[5], (output_dim,))).astype(f32),
    }


# --------------------------------- main ----------------------------------------

if __name__ == "__main__":
    input_dim = 32
    num_experts = 4
    expert_dim = 64
    output_dim = 32
    batch = 64                     # -> block_rows=32, 2 parallel grid steps

    key = jax.random.PRNGKey(0)
    kx, kp = jax.random.split(key)
    x = jax.random.normal(kx, (batch, input_dim), dtype=jnp.float32)
    params = init_params(kp, input_dim, num_experts, expert_dim, output_dim)

    ref = jax.block_until_ready(moe_ref(x, params))

    # f32 MXU path -- strict correctness check.
    out = jax.block_until_ready(moe_pallas(x, pack_params(params)))
    assert out.shape == (batch, output_dim)
    assert jnp.allclose(out, ref, rtol=1e-4, atol=1e-4), "f32 mismatch vs reference"

    # bf16 MXU-operand path (v6e/v7x production setting) -- looser tolerance.
    out_bf16 = jax.block_until_ready(
        moe_pallas(x, pack_params(params, mxu_dtype=jnp.bfloat16)))
    assert out_bf16.shape == (batch, output_dim)
    assert jnp.allclose(out_bf16, ref, rtol=5e-2, atol=5e-2), "bf16 mismatch vs reference"

    print("KERNEL_OK")
</pallas_src>

<mosaic_0001>
module attributes {stable_mosaic.version = 11 : i64} {
  func.func @moe_kernel(%arg0: i32, %arg1: memref<32x32xf32, #tpu.memory_space<vmem>>, %arg2: memref<32x260xf32, #tpu.memory_space<vmem>>, %arg3: memref<1x260xf32, #tpu.memory_space<vmem>>, %arg4: memref<4x256xf32, #tpu.memory_space<vmem>>, %arg5: memref<256x128xf32, #tpu.memory_space<vmem>>, %arg6: memref<1x128xf32, #tpu.memory_space<vmem>>, %arg7: memref<32x128xf32, #tpu.memory_space<vmem>>) attributes {dimension_semantics = [#tpu.dimension_semantics<parallel>], iteration_bounds = array<i64: 2>, scalar_prefetch = 0 : i64, scratch_operands = 0 : i64, tpu.core_type = #tpu.core_type<tc>, window_params = [{transform_indices = @transform_0, window_bounds = array<i64: 32, 32>}, {pipeline_mode = #tpu.pipeline_mode<synchronous>, transform_indices = @transform_1, window_bounds = array<i64: 32, 260>}, {pipeline_mode = #tpu.pipeline_mode<synchronous>, transform_indices = @transform_2, window_bounds = array<i64: 1, 260>}, {pipeline_mode = #tpu.pipeline_mode<synchronous>, transform_indices = @transform_3, window_bounds = array<i64: 4, 256>}, {pipeline_mode = #tpu.pipeline_mode<synchronous>, transform_indices = @transform_4, window_bounds = array<i64: 256, 128>}, {pipeline_mode = #tpu.pipeline_mode<synchronous>, transform_indices = @transform_5, window_bounds = array<i64: 1, 128>}, {transform_indices = @transform_6, window_bounds = array<i64: 32, 128>}]} {
    %c0 = arith.constant 0 : index
    %c0_0 = arith.constant 0 : index
    %0 = vector.load %arg1[%c0, %c0_0] : memref<32x32xf32, #tpu.memory_space<vmem>>, vector<32x32xf32>
    %c0_1 = arith.constant 0 : index
    %c0_2 = arith.constant 0 : index
    %1 = vector.load %arg2[%c0_1, %c0_2] : memref<32x260xf32, #tpu.memory_space<vmem>>, vector<32x260xf32>
    %cst = arith.constant dense<0.000000e+00> : vector<32x260xf32>
    %2 = tpu.matmul %0, %1, %cst {dimension_numbers = #tpu.dot_dimension_numbers<[1], [0], [0], [1], [0, 0, 1, 1], [], []>} : vector<32x32xf32>, vector<32x260xf32>, vector<32x260xf32> -> vector<32x260xf32>
    %c0_3 = arith.constant 0 : index
    %c0_4 = arith.constant 0 : index
    %3 = vector.load %arg3[%c0_3, %c0_4] : memref<1x260xf32, #tpu.memory_space<vmem>>, vector<1x260xf32>
    %4 = vector.broadcast %3 : vector<1x260xf32> to vector<32x260xf32>
    %5 = arith.addf %2, %4 : vector<32x260xf32>
    %6 = vector.extract_strided_slice %5 {offsets = [0, 0], sizes = [32, 256], strides = [1, 1]} : vector<32x260xf32> to vector<32x256xf32>
    %7 = vector.extract_strided_slice %5 {offsets = [0, 256], sizes = [32, 4], strides = [1, 1]} : vector<32x260xf32> to vector<32x4xf32>
    %cst_5 = arith.constant dense<0xFF800000> : vector<32xf32>
    %8 = vector.multi_reduction <maximumf>, %7, %cst_5 [1] : vector<32x4xf32> to vector<32xf32>
    %9 = vector.shape_cast %8 : vector<32xf32> to vector<32x1xf32>
    %10 = vector.broadcast %9 : vector<32x1xf32> to vector<32x4xf32>
    %11 = arith.subf %7, %10 : vector<32x4xf32>
    %12 = math.exp %11 : vector<32x4xf32>
    %cst_6 = arith.constant dense<0.000000e+00> : vector<32xf32>
    %13 = vector.multi_reduction <add>, %12, %cst_6 [1] : vector<32x4xf32> to vector<32xf32>
    %14 = vector.shape_cast %13 : vector<32xf32> to vector<32x1xf32>
    %15 = tpu.reciprocal %14 {approx = true} : vector<32x1xf32> -> vector<32x1xf32>
    %16 = arith.mulf %14, %15 : vector<32x1xf32>
    %cst_7 = arith.constant 2.000000e+00 : f32
    %17 = vector.broadcast %cst_7 : f32 to vector<32x1xf32>
    %18 = arith.subf %17, %16 : vector<32x1xf32>
    %19 = arith.mulf %15, %18 : vector<32x1xf32>
    %20 = vector.broadcast %19 : vector<32x1xf32> to vector<32x4xf32>
    %21 = arith.mulf %12, %20 : vector<32x4xf32>
    %c0_8 = arith.constant 0 : index
    %c0_9 = arith.constant 0 : index
    %22 = vector.load %arg4[%c0_8, %c0_9] : memref<4x256xf32, #tpu.memory_space<vmem>>, vector<4x256xf32>
    %cst_10 = arith.constant dense<0.000000e+00> : vector<32x256xf32>
    %23 = tpu.matmul %21, %22, %cst_10 {dimension_numbers = #tpu.dot_dimension_numbers<[1], [0], [0], [1], [0, 0, 1, 1], [], []>} : vector<32x4xf32>, vector<4x256xf32>, vector<32x256xf32> -> vector<32x256xf32>
    %24 = arith.mulf %23, %6 : vector<32x256xf32>
    %c0_11 = arith.constant 0 : index
    %c0_12 = arith.constant 0 : index
    %25 = vector.load %arg5[%c0_11, %c0_12] : memref<256x128xf32, #tpu.memory_space<vmem>>, vector<256x128xf32>
    %cst_13 = arith.constant dense<0.000000e+00> : vector<32x128xf32>
    %26 = tpu.matmul %24, %25, %cst_13 {dimension_numbers = #tpu.dot_dimension_numbers<[1], [0], [0], [1], [0, 0, 1, 1], [], []>} : vector<32x256xf32>, vector<256x128xf32>, vector<32x128xf32> -> vector<32x128xf32>
    %c0_14 = arith.constant 0 : index
    %c0_15 = arith.constant 0 : index
    %27 = vector.load %arg6[%c0_14, %c0_15] : memref<1x128xf32, #tpu.memory_space<vmem>>, vector<1x128xf32>
    %28 = vector.broadcast %27 : vector<1x128xf32> to vector<32x128xf32>
    %29 = arith.addf %26, %28 : vector<32x128xf32>
    %c0_16 = arith.constant 0 : index
    %c0_17 = arith.constant 0 : index
    %30 = vector.load %arg7[%c0_16, %c0_17] : memref<32x128xf32, #tpu.memory_space<vmem>>, vector<32x128xf32>
    tpu.vector_store %arg7[%c0_16, %c0_17], %29 {strides = array<i32>} : memref<32x128xf32, #tpu.memory_space<vmem>>, vector<32x128xf32>,
    return
  }
  func.func @transform_0(%arg0: i32) -> (i32, i32) {
    %c0_i32 = arith.constant 0 : i32
    %c0_i32_0 = arith.constant 0 : i32
    return %arg0, %c0_i32 : i32, i32
  }
  func.func @transform_1(%arg0: i32) -> (i32, i32) {
    %c0_i32 = arith.constant 0 : i32
    %c0_i32_0 = arith.constant 0 : i32
    %c0_i32_1 = arith.constant 0 : i32
    return %c0_i32, %c0_i32_0 : i32, i32
  }
  func.func @transform_2(%arg0: i32) -> (i32, i32) {
    %c0_i32 = arith.constant 0 : i32
    %c0_i32_0 = arith.constant 0 : i32
    %c0_i32_1 = arith.constant 0 : i32
    return %c0_i32, %c0_i32_0 : i32, i32
  }
  func.func @transform_3(%arg0: i32) -> (i32, i32) {
    %c0_i32 = arith.constant 0 : i32
    %c0_i32_0 = arith.constant 0 : i32
    %c0_i32_1 = arith.constant 0 : i32
    return %c0_i32, %c0_i32_0 : i32, i32
  }
  func.func @transform_4(%arg0: i32) -> (i32, i32) {
    %c0_i32 = arith.constant 0 : i32
    %c0_i32_0 = arith.constant 0 : i32
    %c0_i32_1 = arith.constant 0 : i32
    return %c0_i32, %c0_i32_0 : i32, i32
  }
  func.func @transform_5(%arg0: i32) -> (i32, i32) {
    %c0_i32 = arith.constant 0 : i32
    %c0_i32_0 = arith.constant 0 : i32
    %c0_i32_1 = arith.constant 0 : i32
    return %c0_i32, %c0_i32_0 : i32, i32
  }
  func.func @transform_6(%arg0: i32) -> (i32, i32) {
    %c0_i32 = arith.constant 0 : i32
    %c0_i32_0 = arith.constant 0 : i32
    return %arg0, %c0_i32 : i32, i32
  }
}

</mosaic_0001>

<llo_original>
// kernel: tpu_custom_call.1
$region0: #{tpu_custom_call.1}
  #allocation0 [shape = 'u32[]', space=smem, size = 0x4, offset = 0x4, fixed_abs, tag = 'smem constant byte address 0x4 - core index']
  #allocation1 [shape = 'u32[72,128]{1,0:T(1,128)}', space=vmem, size = 0x9000, scoped, tag = 'internal scratch']
  %s0 = inlined_call_operand.vmem [shape: f32[64,32], index: 0, kind: input, shape index: {}]
  %s1 = inlined_call_operand.vmem [shape: f32[32,260], index: 1, kind: input, shape index: {}]
  %s2 = inlined_call_operand.hbm [shape: f32[1,260], index: 2, kind: input, shape index: {}]
  %s3 = inlined_call_operand.hbm [shape: f32[4,256], index: 3, kind: input, shape index: {}]
  %s4 = inlined_call_operand.hbm [shape: f32[256,128], index: 4, kind: input, shape index: {}]
  %s5 = inlined_call_operand.vmem [shape: f32[1,128], index: 5, kind: input, shape index: {}]
  %s6 = inlined_call_operand.hbm [shape: f32[64,128], index: 6, kind: output, shape index: {}]
  %s7 = sld [smem:[#allocation0]]
  $region69: #{tpu_custom_call.1} parent=0
    _
  %s9 = ssub.s32 1, %s7
  %s10 = scalar_select 0, %s9, %s7
  $region1: #{tpu_custom_call.1} parent=0
    #allocation2 [shape = 'u8[1536]{0}', space=vmem, size = 0x800, scoped, tag = 'input window, operand 2, single buffered']
    #allocation3 [shape = 's32[2]{0}', space=sflag, size = 0x8, scoped, tag = 'scoped memory for tpu_custom_call.1']
    #allocation4 [shape = 's32[2]{0}', space=sflag, size = 0x8, scoped, tag = 'scoped memory for tpu_custom_call.1']
    #allocation5 [shape = 'u8[4096]{0}', space=vmem, size = 0x1000, scoped, tag = 'input window, operand 3, single buffered']
    #allocation6 [shape = 's32[1]{0}', space=sflag, size = 0x4, scoped, tag = 'scoped memory for tpu_custom_call.1']
    #allocation7 [shape = 'u8[131072]{0}', space=vmem, size = 0x20000, scoped, tag = 'input window, operand 4, single buffered']
    #allocation8 [shape = 'u8[32768]{0}', space=vmem, size = 0x8000, scoped, tag = 'output window, operand 0']
    %11 = vsyncpa [#allocation3], 0
    %12 = vsyncpa [#allocation6], 0
    %13 = vsyncpa [#allocation4], 0
    %s14 = scalar_lea.sflag [#allocation4], 1
    %15 = vsyncpa %s14, 0
    loop: start=0, step=1, limit=4
    $region2: #{tpu_custom_call.1} parent=1 // loop_pre_header
      _
    $region3: #{tpu_custom_call.1} parent=1 // loop_header
      %s17 = sphi 0, %s21
      %p18 = scmp.ge.s32.totalorder %s17, 4
      %s27 = sphi 0, %s29
      %s30 = sphi 0, %s27
      %s31 = sphi 0, %s30
      %s47 = sphi 0, %s31
      %s51 = sphi 0, %s51
      %s53 = sphi 0, %s51
      %s54 = sphi 0, %s53
      %s68 = sphi 0, %s54
      %s72 = sphi 0, %s72
      %s74 = sphi 0, %s72
      %s75 = sphi 0, %s74
      %s89 = sphi 0, %s75
      %s93 = sphi 0, %s93
      %s95 = sphi 0, %s93
      %s96 = sphi 0, %s95
      %s110 = sphi 0, %s96
      %s114 = sphi 0, %s114
      %s116 = sphi 0, %s114
      %s117 = sphi 0, %s116
      %s131 = sphi 0, %s117
      %s135 = sphi 0, %s135
      %s137 = sphi 0, %s135
      %s138 = sphi 0, %s137
      %s152 = sphi 0, %s138
      %s158 = sphi 0, %s160
      %s161 = sphi 0, %s158
      %s162 = sphi 0, %s161
      %s178 = sphi 0, %s162
    $region4: #{tpu_custom_call.1} parent=1 // loop_header_branch
      %20 = sbr.rel (%p18) target = $region8
    $region5: #{tpu_custom_call.1} parent=1 // loop_body
      %s22 = ssub.s32 %s17, 1
      %s23 = ssub.s32 %s17, 2
      %s24 = sadd.s32 %s17, 1
      %s25 = ssub.s32 %s17, %s24
      %p26 = scmp.eq.s32.totalorder %s25, 0
      %s28 = sadd.s32 %s27, 1
      %s29 = scalar_select %p26, %s27, %s28
      %p32 = pneg %p26
      %p33 = scmp.eq.s32.totalorder %s17, 1
      %p34 = por %p32, %p33
      %p35 = scmp.ne.s32.totalorder %s27, %s30
      %p36 = scmp.eq.s32.totalorder %s17, 0
      %p37 = por %p35, %p36
      %p38 = scmp.ne.s32.totalorder %s27, %s30
      %p39 = scmp.eq.s32.totalorder %s22, 1
      %p40 = por %p38, %p39
      %p41 = scmp.ne.s32.totalorder %s30, %s31
      %p42 = scmp.eq.s32.totalorder %s22, 0
      %p43 = por %p41, %p42
      %p44 = scmp.ne.s32.totalorder %s30, %s31
      %p45 = scmp.eq.s32.totalorder %s23, 1
      %p46 = por %p44, %p45
      %p48 = scmp.ne.s32.totalorder %s31, %s47
      %p49 = scmp.eq.s32.totalorder %s23, 0
      %p50 = por %p48, %p49
      %s52 = sadd.s32 %s51, 1
      %p55 = scmp.eq.s32.totalorder %s17, 1
      %p56 = scmp.ne.s32.totalorder %s51, %s53
      %p57 = scmp.eq.s32.totalorder %s17, 0
      %p58 = por %p56, %p57
      %p59 = scmp.ne.s32.totalorder %s51, %s53
      %p60 = scmp.eq.s32.totalorder %s22, 1
      %p61 = por %p59, %p60
      %p62 = scmp.ne.s32.totalorder %s53, %s54
      %p63 = scmp.eq.s32.totalorder %s22, 0
      %p64 = por %p62, %p63
      %p65 = scmp.ne.s32.totalorder %s53, %s54
      %p66 = scmp.eq.s32.totalorder %s23, 1
      %p67 = por %p65, %p66
      %p69 = scmp.ne.s32.totalorder %s54, %s68
      %p70 = scmp.eq.s32.totalorder %s23, 0
      %p71 = por %p69, %p70
      %s73 = sadd.s32 %s72, 1
      %p76 = scmp.eq.s32.totalorder %s17, 1
      %p77 = scmp.ne.s32.totalorder %s72, %s74
      %p78 = scmp.eq.s32.totalorder %s17, 0
      %p79 = por %p77, %p78
      %p80 = scmp.ne.s32.totalorder %s72, %s74
      %p81 = scmp.eq.s32.totalorder %s22, 1
      %p82 = por %p80, %p81
      %p83 = scmp.ne.s32.totalorder %s74, %s75
      %p84 = scmp.eq.s32.totalorder %s22, 0
      %p85 = por %p83, %p84
      %p86 = scmp.ne.s32.totalorder %s74, %s75
      %p87 = scmp.eq.s32.totalorder %s23, 1
      %p88 = por %p86, %p87
      %p90 = scmp.ne.s32.totalorder %s75, %s89
      %p91 = scmp.eq.s32.totalorder %s23, 0
      %p92 = por %p90, %p91
      %s94 = sadd.s32 %s93, 1
      %p97 = scmp.eq.s32.totalorder %s17, 1
      %p98 = scmp.ne.s32.totalorder %s93, %s95
      %p99 = scmp.eq.s32.totalorder %s17, 0
      %p100 = por %p98, %p99
      %p101 = scmp.ne.s32.totalorder %s93, %s95
      %p102 = scmp.eq.s32.totalorder %s22, 1
      %p103 = por %p101, %p102
      %p104 = scmp.ne.s32.totalorder %s95, %s96
      %p105 = scmp.eq.s32.totalorder %s22, 0
      %p106 = por %p104, %p105
      %p107 = scmp.ne.s32.totalorder %s95, %s96
      %p108 = scmp.eq.s32.totalorder %s23, 1
      %p109 = por %p107, %p108
      %p111 = scmp.ne.s32.totalorder %s96, %s110
      %p112 = scmp.eq.s32.totalorder %s23, 0
      %p113 = por %p111, %p112
      %s115 = sadd.s32 %s114, 1
      %p118 = scmp.eq.s32.totalorder %s17, 1
      %p119 = scmp.ne.s32.totalorder %s114, %s116
      %p120 = scmp.eq.s32.totalorder %s17, 0
      %p121 = por %p119, %p120
      %p122 = scmp.ne.s32.totalorder %s114, %s116
      %p123 = scmp.eq.s32.totalorder %s22, 1
      %p124 = por %p122, %p123
      %p125 = scmp.ne.s32.totalorder %s116, %s117
      %p126 = scmp.eq.s32.totalorder %s22, 0
      %p127 = por %p125, %p126
      %p128 = scmp.ne.s32.totalorder %s116, %s117
      %p129 = scmp.eq.s32.totalorder %s23, 1
      %p130 = por %p128, %p129
      %p132 = scmp.ne.s32.totalorder %s117, %s131
      %p133 = scmp.eq.s32.totalorder %s23, 0
      %p134 = por %p132, %p133
      %s136 = sadd.s32 %s135, 1
      %p139 = scmp.eq.s32.totalorder %s17, 1
      %p140 = scmp.ne.s32.totalorder %s135, %s137
      %p141 = scmp.eq.s32.totalorder %s17, 0
      %p142 = por %p140, %p141
      %p143 = scmp.ne.s32.totalorder %s135, %s137
      %p144 = scmp.eq.s32.totalorder %s22, 1
      %p145 = por %p143, %p144
      %p146 = scmp.ne.s32.totalorder %s137, %s138
      %p147 = scmp.eq.s32.totalorder %s22, 0
      %p148 = por %p146, %p147
      %p149 = scmp.ne.s32.totalorder %s137, %s138
      %p150 = scmp.eq.s32.totalorder %s23, 1
      %p151 = por %p149, %p150
      %p153 = scmp.ne.s32.totalorder %s138, %s152
      %p154 = scmp.eq.s32.totalorder %s23, 0
      %p155 = por %p153, %p154
      %s156 = ssub.s32 %s17, %s24
      %p157 = scmp.eq.s32.totalorder %s156, 0
      %s159 = sadd.s32 %s158, 1
      %s160 = scalar_select %p157, %s158, %s159
      %p163 = pneg %p157
      %p164 = scmp.eq.s32.totalorder %s17, 1
      %p165 = por %p163, %p164
      %p166 = scmp.ne.s32.totalorder %s158, %s161
      %p167 = scmp.eq.s32.totalorder %s17, 0
      %p168 = por %p166, %p167
      %p169 = scmp.ne.s32.totalorder %s158, %s161
      %p170 = scmp.eq.s32.totalorder %s22, 1
      %p171 = por %p169, %p170
      %p172 = scmp.ne.s32.totalorder %s161, %s162
      %p173 = scmp.eq.s32.totalorder %s22, 0
      %p174 = por %p172, %p173
      %p175 = scmp.ne.s32.totalorder %s161, %s162
      %p176 = scmp.eq.s32.totalorder %s23, 1
      %p177 = por %p175, %p176
      %p179 = scmp.ne.s32.totalorder %s162, %s178
      %p180 = scmp.eq.s32.totalorder %s23, 0
      %p181 = por %p179, %p180
      %p182 = scmp.le.s32.totalorder 1, %s17
      %p183 = scmp.lt.s32.totalorder %s17, 3
      %p184 = pnand %p182, %p183
      %p185 = pneg %p184
      // Predicated region
      $region9: #{tpu_custom_call.1} parent=5 // pred_check
        _
      $region10: #{tpu_custom_call.1} parent=5 // pred_check_branch
        %187 = sbr.rel (%p184) target = $region12
      $region11: #{tpu_custom_call.1} parent=5 // pred_region
        %s188 = ssub.s32 %s17, 1
        // Predicated region
        $region13: #{tpu_custom_call.1} parent=11 // pred_check
          %p189 = pneg %p64
        $region14: #{tpu_custom_call.1} parent=11 // pred_check_branch
          %191 = sbr.rel (%p189) target = $region16
        $region15: #{tpu_custom_call.1} parent=11 // pred_region
          _
        $region16: #{tpu_custom_call.1} parent=11 // pred_fallthru
          _
        // Predicated region
        $region17: #{tpu_custom_call.1} parent=11 // pred_check
          %p192 = pneg %p85
        $region18: #{tpu_custom_call.1} parent=11 // pred_check_branch
          %194 = sbr.rel (%p192) target = $region20
        $region19: #{tpu_custom_call.1} parent=11 // pred_region
          %196 = vsyncadd [#allocation3], 0
          %s198 = sshll.u32 %s2, 4
          %s199 = int_to_ptr.hbm [resolvable:$true] %s198
          %s200 = sshll.u32 [#allocation2], 4
          %s201 = int_to_ptr.vmem [resolvable:$true] %s200
          %203 = dma.hbm_to_vmem [thread:$0]  %s199, 48, %s201, [#allocation3]
        $region20: #{tpu_custom_call.1} parent=11 // pred_fallthru
          _
        // Predicated region
        $region21: #{tpu_custom_call.1} parent=11 // pred_check
          %p204 = pneg %p106
        $region22: #{tpu_custom_call.1} parent=11 // pred_check_branch
          %206 = sbr.rel (%p204) target = $region24
        $region23: #{tpu_custom_call.1} parent=11 // pred_region
          %208 = vsyncadd [#allocation6], 0
          %s210 = sshll.u32 %s3, 4
          %s211 = int_to_ptr.hbm [resolvable:$true] %s210
          %s212 = sshll.u32 [#allocation5], 4
          %s213 = int_to_ptr.vmem [resolvable:$true] %s212
          %215 = dma.hbm_to_vmem [thread:$0]  %s211, 128, %s213, [#allocation6]
        $region24: #{tpu_custom_call.1} parent=11 // pred_fallthru
          _
        // Predicated region
        $region25: #{tpu_custom_call.1} parent=11 // pred_check
          %p216 = pneg %p127
        $region26: #{tpu_custom_call.1} parent=11 // pred_check_branch
          %218 = sbr.rel (%p216) target = $region28
        $region27: #{tpu_custom_call.1} parent=11 // pred_region
          %220 = vsyncadd [#allocation6], 0
          %s221 = sshll.u32 %s4, 4
          %s222 = int_to_ptr.hbm [resolvable:$true] %s221
          %s223 = sshll.u32 [#allocation7], 4
          %s224 = int_to_ptr.vmem [resolvable:$true] %s223
          %229 = dma.hbm_to_vmem [thread:$0]  %s222, 4096, %s224, [#allocation6], 128, 128, 8
        $region28: #{tpu_custom_call.1} parent=11 // pred_fallthru
          _
        // Predicated region
        $region29: #{tpu_custom_call.1} parent=11 // pred_check
          %p230 = pneg %p148
        $region30: #{tpu_custom_call.1} parent=11 // pred_check_branch
          %232 = sbr.rel (%p230) target = $region32
        $region31: #{tpu_custom_call.1} parent=11 // pred_region
          _
        $region32: #{tpu_custom_call.1} parent=11 // pred_fallthru
          _
      $region12: #{tpu_custom_call.1} parent=5 // pred_fallthru
        _
      %p233 = scmp.lt.s32.totalorder %s17, 2
      // Predicated region
      $region33: #{tpu_custom_call.1} parent=5 // pred_check
        %p234 = pneg %p233
      $region34: #{tpu_custom_call.1} parent=5 // pred_check_branch
        %236 = sbr.rel (%p234) target = $region36
      $region35: #{tpu_custom_call.1} parent=5 // pred_region
        // Predicated region
        $region37: #{tpu_custom_call.1} parent=35 // pred_check
          %p237 = pneg %p37
        $region38: #{tpu_custom_call.1} parent=35 // pred_check_branch
          %239 = sbr.rel (%p237) target = $region40
        $region39: #{tpu_custom_call.1} parent=35 // pred_region
          %s240 = smul.u32 4, %s17
          %p241 = scmp.lt.s32.totalorder %s240, 7
          %s242 = scalar_select %p241, %s240, 7
          %s243 = smul.addr %s242, 8
          %s244 = scalar_lea.vmem %s0, %s243
          %s245 = smul.u32 4, %s17
        $region40: #{tpu_custom_call.1} parent=35 // pred_fallthru
          _
      $region36: #{tpu_custom_call.1} parent=5 // pred_fallthru
        _
      %p246 = scmp.le.s32.totalorder 1, %s17
      %p247 = scmp.lt.s32.totalorder %s17, 3
      %p248 = pnand %p246, %p247
      %p249 = pneg %p248
      // Predicated region
      $region41: #{tpu_custom_call.1} parent=5 // pred_check
        _
      $region42: #{tpu_custom_call.1} parent=5 // pred_check_branch
        %251 = sbr.rel (%p248) target = $region44
      $region43: #{tpu_custom_call.1} parent=5 // pred_region
        %s252 = ssub.s32 %s17, 1
        // Predicated region
        $region45: #{tpu_custom_call.1} parent=43 // pred_check
          %p253 = pneg %p85
        $region46: #{tpu_custom_call.1} parent=43 // pred_check_branch
          %255 = sbr.rel (%p253) target = $region48
        $region47: #{tpu_custom_call.1} parent=43 // pred_region
          %257 = dma.done [#allocation3], 48
        $region48: #{tpu_custom_call.1} parent=43 // pred_fallthru
          _
        // Predicated region
        $region49: #{tpu_custom_call.1} parent=43 // pred_check
          %p258 = pneg %p106
        $region50: #{tpu_custom_call.1} parent=43 // pred_check_branch
          %260 = sbr.rel (%p258) target = $region52
        $region51: #{tpu_custom_call.1} parent=43 // pred_region
          %262 = dma.done [#allocation6], 128
        $region52: #{tpu_custom_call.1} parent=43 // pred_fallthru
          _
        // Predicated region
        $region53: #{tpu_custom_call.1} parent=43 // pred_check
          %p263 = pneg %p127
        $region54: #{tpu_custom_call.1} parent=43 // pred_check_branch
          %265 = sbr.rel (%p263) target = $region56
        $region55: #{tpu_custom_call.1} parent=43 // pred_region
          %267 = dma.done [#allocation6], 4096
        $region56: #{tpu_custom_call.1} parent=43 // pred_fallthru
          _
        %s268 = smul.u32 4, %s22
        %p269 = scmp.lt.s32.totalorder %s268, 7
        %s270 = scalar_select %p269, %s268, 7
        %s271 = smul.addr %s270, 8
        %s272 = scalar_lea.vmem %s0, %s271
        %p273 = pneg %p43
        %p274 = pneg %p40
        %p275 = pneg %p64
        %p276 = pneg %p61
        %p277 = pneg %p85
        %p278 = pneg %p82
        %p279 = pneg %p106
        %p280 = pneg %p103
        %p281 = pneg %p127
        %p282 = pneg %p124
        %p283 = pneg %p148
        %p284 = pneg %p145
        %p285 = pneg %p174
        %p286 = pneg %p171
        %s287 = sand.u32 %s161, 1
        %s288 = scalar_lea.sflag [#allocation4], %s287
        %s289 = sand.u32 %s161, 1
        %s290 = smul.addr %s289, 32
        %s291 = scalar_lea.vmem [#allocation8], %s290
        %s292 = smul.u32 4, %s22
        %p293 = scmp.lt.s32.totalorder %s292, 7
        %s294 = scalar_select %p293, %s292, 7
        %s295 = smul.addr %s294, 8
        %s296 = scalar_lea.vmem %s0, %s295
        %s297 = smul.u32 4, %s22
        %s298 = smul.u32 4, %s22
        %v299 = vld [vmem:[%s296] sm:$0xff]
        %v300 = vld [vmem:[%s296 + $0x8] sm:$0xff]
        %v301 = vld [vmem:[%s296 + $0x10] sm:$0xff]
        %v302 = vld [vmem:[%s296 + $0x18] sm:$0xff]
        %v303 = vld [vmem:[%s1] sm:$0xff]
        %v304 = vld [vmem:[%s1 + $0x8] sm:$0xff]
        %v305 = vld [vmem:[%s1 + $0x10] sm:$0xff]
        %v306 = vld [vmem:[%s1 + $0x18] sm:$0xff]
        %v307 = vld [vmem:[%s1 + $0x20] sm:$0xff]
        %v308 = vld [vmem:[%s1 + $0x28] sm:$0xff]
        %v309 = vld [vmem:[%s1 + $0x30] sm:$0xff]
        %v310 = vld [vmem:[%s1 + $0x38] sm:$0xff]
        %v311 = vld [vmem:[%s1 + $0x40] sm:$0xff]
        %v312 = vld [vmem:[%s1 + $0x48] sm:$0xff]
        %v313 = vld [vmem:[%s1 + $0x50] sm:$0xff]
        %v314 = vld [vmem:[%s1 + $0x58] sm:$0xff]
        %v315 = vld [vmem:[#allocation2] sm:$0x7]
        %v317 = vperm.slane %v315, 0
        %v318 = vperm.slane %v315, 1
        %v319 = vperm.slane %v315, 2
        %vm323 = vcmask 261120
        %v325 = vsel %vm323, %v299, 0
        %v328 = vsel %vm323, %v300, 0
        %v331 = vsel %vm323, %v301, 0
        %v334 = vsel %vm323, %v302, 0
        %336 = vmatpush.msra.mxu0 0.0
        %337 = vmatpush.msra.mxu0 0.0
        %338 = vmatpush.msra.mxu0 0.0
        %339 = vmatpush.msra.mxu0 0.0
        %340 = vmatpush.msra.mxu0 0.0
        %341 = vmatpush.msra.mxu0 0.0
        %342 = vmatpush.msra.mxu0 0.0
        %343 = vmatpush.msra.mxu0 0.0
        %344 = vmatpush.msra.mxu0 0.0
        %345 = vmatpush.msra.mxu0 0.0
        %346 = vmatpush.msra.mxu0 0.0
        %347 = vmatpush.msra.mxu0 0.0
        %348 = vmatpush.msra.mxu0 %v312
        %349 = vmatpush.msra.mxu0 %v309
        %350 = vmatpush.msra.mxu0 %v306
        %351 = vmatpush.msra.mxu0 %v303
        %352 = vmatmul.f32.gmra.mxu0 %v325
        %v353 = vpop.f32.mrf.mxu0
        %v354 = vadd.f32 %v317, %v353
        %355 = vmatmul.f32.gmra.mxu0 %v328
        %v356 = vpop.f32.mrf.mxu0
        %v357 = vadd.f32 %v317, %v356
        %358 = vmatmul.f32.gmra.mxu0 %v331
        %v359 = vpop.f32.mrf.mxu0
        %v360 = vadd.f32 %v317, %v359
        %361 = vmatmul.f32.gmra.mxu0 %v334
        %v362 = vpop.f32.mrf.mxu0
        %v363 = vadd.f32 %v317, %v362
        %364 = vdwg.mxu0
        %365 = vmatpush.msra.mxu0 0.0
        %366 = vmatpush.msra.mxu0 0.0
        %367 = vmatpush.msra.mxu0 0.0
        %368 = vmatpush.msra.mxu0 0.0
        %369 = vmatpush.msra.mxu0 0.0
        %370 = vmatpush.msra.mxu0 0.0
        %371 = vmatpush.msra.mxu0 0.0
        %372 = vmatpush.msra.mxu0 0.0
        %373 = vmatpush.msra.mxu0 0.0
        %374 = vmatpush.msra.mxu0 0.0
        %375 = vmatpush.msra.mxu0 0.0
        %376 = vmatpush.msra.mxu0 0.0
        %377 = vmatpush.msra.mxu0 %v313
        %378 = vmatpush.msra.mxu0 %v310
        %379 = vmatpush.msra.mxu0 %v307
        %380 = vmatpush.msra.mxu0 %v304
        %381 = vmatmul.f32.gmra.mxu0 %v325
        %v382 = vpop.f32.mrf.mxu0
        %v383 = vadd.f32 %v318, %v382
        %384 = vmatmul.f32.gmra.mxu0 %v328
        %v385 = vpop.f32.mrf.mxu0
        %v386 = vadd.f32 %v318, %v385
        %387 = vmatmul.f32.gmra.mxu0 %v331
        %v388 = vpop.f32.mrf.mxu0
        %v389 = vadd.f32 %v318, %v388
        %390 = vmatmul.f32.gmra.mxu0 %v334
        %v391 = vpop.f32.mrf.mxu0
        %v392 = vadd.f32 %v318, %v391
        %393 = vdwg.mxu0
        %394 = vmatpush.msra.mxu0 0.0
        %395 = vmatpush.msra.mxu0 0.0
        %396 = vmatpush.msra.mxu0 0.0
        %397 = vmatpush.msra.mxu0 0.0
        %398 = vmatpush.msra.mxu0 0.0
        %399 = vmatpush.msra.mxu0 0.0
        %400 = vmatpush.msra.mxu0 0.0
        %401 = vmatpush.msra.mxu0 0.0
        %402 = vmatpush.msra.mxu0 0.0
        %403 = vmatpush.msra.mxu0 0.0
        %404 = vmatpush.msra.mxu0 0.0
        %405 = vmatpush.msra.mxu0 0.0
        %406 = vmatpush.msra.mxu0 %v314
        %407 = vmatpush.msra.mxu0 %v311
        %408 = vmatpush.msra.mxu0 %v308
        %409 = vmatpush.msra.mxu0 %v305
        %410 = vmatmul.f32.gmra.mxu0 %v325
        %v411 = vpop.f32.mrf.mxu0
        %v412 = vadd.f32 %v319, %v411
        %413 = vmatmul.f32.gmra.mxu0 %v328
        %v414 = vpop.f32.mrf.mxu0
        %v415 = vadd.f32 %v319, %v414
        %416 = vmatmul.f32.gmra.mxu0 %v331
        %v417 = vpop.f32.mrf.mxu0
        %v418 = vadd.f32 %v319, %v417
        %419 = vmatmul.f32.gmra.mxu0 %v334
        %v420 = vpop.f32.mrf.mxu0
        %v421 = vadd.f32 %v319, %v420
        %422 = vdwg.mxu0
        %vm423 = vcmask 31744
        %v424 = vsel %vm423, %v412, -inf
        %425 = vmax.xlane.f32.xlu0 %v424
        %v426 = vpop.xlane.xlu0 %425
        %v427 = vsel %vm423, %v415, -inf
        %428 = vmax.xlane.f32.xlu0 %v427
        %v429 = vpop.xlane.xlu0 %428
        %v430 = vsel %vm423, %v418, -inf
        %431 = vmax.xlane.f32.xlu0 %v430
        %v432 = vpop.xlane.xlu0 %431
        %v433 = vsel %vm423, %v421, -inf
        %434 = vmax.xlane.f32.xlu0 %v433
        %v435 = vpop.xlane.xlu0 %434
        %v436 = vsub.f32 %v412, %v426
        %v437 = vsub.f32 %v415, %v429
        %v438 = vsub.f32 %v418, %v432
        %v439 = vsub.f32 %v421, %v435
        %v440 = vmul.f32 %v436, 1.442695
        %v441 = vpow.pop %v440
        %v442 = vmul.f32 %v437, 1.442695
        %v443 = vpow.pop %v442
        %v444 = vmul.f32 %v438, 1.442695
        %v445 = vpow.pop %v444
        %v446 = vmul.f32 %v439, 1.442695
        %v447 = vpow.pop %v446
        %v448 = vsel %vm423, %v441, 0.0
        %449 = vadd.xlane.f32.xlu0 %v448
        %v450 = vpop.xlane.xlu0 %449
        %v451 = vsel %vm423, %v443, 0.0
        %452 = vadd.xlane.f32.xlu0 %v451
        %v453 = vpop.xlane.xlu0 %452
        %v454 = vsel %vm423, %v445, 0.0
        %455 = vadd.xlane.f32.xlu0 %v454
        %v456 = vpop.xlane.xlu0 %455
        %v457 = vsel %vm423, %v447, 0.0
        %458 = vadd.xlane.f32.xlu0 %v457
        %v459 = vpop.xlane.xlu0 %458
        %v460 = vrcp.pop %v450
        %v461 = vrcp.pop %v453
        %v462 = vrcp.pop %v456
        %v463 = vrcp.pop %v459
        %v464 = vmul.f32 %v450, %v460
        %v465 = vmul.f32 %v453, %v461
        %v466 = vmul.f32 %v456, %v462
        %v467 = vmul.f32 %v459, %v463
        %v468 = vsub.f32 2.0, %v464
        %v469 = vsub.f32 2.0, %v465
        %v470 = vsub.f32 2.0, %v466
        %v471 = vsub.f32 2.0, %v467
        %v472 = vmul.f32 %v460, %v468
        %v473 = vmul.f32 %v461, %v469
        %v474 = vmul.f32 %v462, %v470
        %v475 = vmul.f32 %v463, %v471
        %v476 = vmul.f32 %v441, %v472
        %v477 = vmul.f32 %v443, %v473
        %v478 = vmul.f32 %v445, %v474
        %v479 = vmul.f32 %v447, %v475
        %v480 = vld [vmem:[#allocation5] sm:$0xff]
        %482 = vst [vmem:[#allocation1] ss:$2 sm:$0xff] %v480
        %v483 = vld.sshfl [vmem:[#allocation1] sm:$0xff pattern:$0x75316420]
        %v484 = vld.sshfl [vmem:[#allocation1 + $0x8] sm:$0xff pattern:$0x75316420]
        %v486 = vsel %vm423, %v476, 0
        %v489 = vsel %vm423, %v477, 0
        %v492 = vsel %vm423, %v478, 0
        %v495 = vsel %vm423, %v479, 0
        %vm497 = vcmask 1043456
        %v498 = vsel %vm497, %v483, 0
        %v500 = vsel %vm497, %v484, 0
        %502 = vmatpush.msra.mxu0 0.0
        %503 = vmatpush.msra.mxu0 0.0
        %504 = vmatpush.msra.mxu0 0.0
        %505 = vmatpush.msra.mxu0 0.0
        %506 = vmatpush.msra.mxu0 0.0
        %507 = vmatpush.msra.mxu0 0.0
        %508 = vmatpush.msra.mxu0 0.0
        %509 = vmatpush.msra.mxu0 0.0
        %510 = vmatpush.msra.mxu0 0.0
        %511 = vmatpush.msra.mxu0 0.0
        %512 = vmatpush.msra.mxu0 0.0
        %513 = vmatpush.msra.mxu0 0.0
        %514 = vmatpush.msra.mxu0 0.0
        %515 = vmatpush.msra.mxu0 0.0
        %516 = vmatpush.msra.mxu0 0.0
        %517 = vmatpush.msra.mxu0 %v498
        %518 = vmatmul.f32.gmra.mxu0 %v486
        %v519 = vpop.f32.mrf.mxu0
        %v520 = vadd.f32 0.0, %v519
        %521 = vmatmul.f32.gmra.mxu0 %v489
        %v522 = vpop.f32.mrf.mxu0
        %v523 = vadd.f32 0.0, %v522
        %524 = vmatmul.f32.gmra.mxu0 %v492
        %v525 = vpop.f32.mrf.mxu0
        %v526 = vadd.f32 0.0, %v525
        %527 = vmatmul.f32.gmra.mxu0 %v495
        %v528 = vpop.f32.mrf.mxu0
        %v529 = vadd.f32 0.0, %v528
        %530 = vdwg.mxu0
        %531 = vmatpush.msra.mxu0 0.0
        %532 = vmatpush.msra.mxu0 0.0
        %533 = vmatpush.msra.mxu0 0.0
        %534 = vmatpush.msra.mxu0 0.0
        %535 = vmatpush.msra.mxu0 0.0
        %536 = vmatpush.msra.mxu0 0.0
        %537 = vmatpush.msra.mxu0 0.0
        %538 = vmatpush.msra.mxu0 0.0
        %539 = vmatpush.msra.mxu0 0.0
        %540 = vmatpush.msra.mxu0 0.0
        %541 = vmatpush.msra.mxu0 0.0
        %542 = vmatpush.msra.mxu0 0.0
        %543 = vmatpush.msra.mxu0 0.0
        %544 = vmatpush.msra.mxu0 0.0
        %545 = vmatpush.msra.mxu0 0.0
        %546 = vmatpush.msra.mxu0 %v500
        %547 = vmatmul.f32.gmra.mxu0 %v486
        %v548 = vpop.f32.mrf.mxu0
        %v549 = vadd.f32 0.0, %v548
        %550 = vmatmul.f32.gmra.mxu0 %v489
        %v551 = vpop.f32.mrf.mxu0
        %v552 = vadd.f32 0.0, %v551
        %553 = vmatmul.f32.gmra.mxu0 %v492
        %v554 = vpop.f32.mrf.mxu0
        %v555 = vadd.f32 0.0, %v554
        %556 = vmatmul.f32.gmra.mxu0 %v495
        %v557 = vpop.f32.mrf.mxu0
        %v558 = vadd.f32 0.0, %v557
        %559 = vdwg.mxu0
        %v560 = vmul.f32 %v520, %v354
        %v561 = vmul.f32 %v549, %v383
        %v562 = vmul.f32 %v523, %v357
        %v563 = vmul.f32 %v552, %v386
        %v564 = vmul.f32 %v526, %v360
        %v565 = vmul.f32 %v555, %v389
        %v566 = vmul.f32 %v529, %v363
        %v567 = vmul.f32 %v558, %v392
        %v568 = vld [vmem:[#allocation7] sm:$0xff]
        %v569 = vld [vmem:[#allocation7 + $0x8] sm:$0xff]
        %v570 = vld [vmem:[#allocation7 + $0x10] sm:$0xff]
        %v571 = vld [vmem:[#allocation7 + $0x18] sm:$0xff]
        %v572 = vld [vmem:[#allocation7 + $0x20] sm:$0xff]
        %v573 = vld [vmem:[#allocation7 + $0x28] sm:$0xff]
        %v574 = vld [vmem:[#allocation7 + $0x30] sm:$0xff]
        %v575 = vld [vmem:[#allocation7 + $0x38] sm:$0xff]
        %v576 = vld [vmem:[#allocation7 + $0x40] sm:$0xff]
        %v577 = vld [vmem:[#allocation7 + $0x48] sm:$0xff]
        %v578 = vld [vmem:[#allocation7 + $0x50] sm:$0xff]
        %v579 = vld [vmem:[#allocation7 + $0x58] sm:$0xff]
        %v580 = vld [vmem:[#allocation7 + $0x60] sm:$0xff]
        %v581 = vld [vmem:[#allocation7 + $0x68] sm:$0xff]
        %v582 = vld [vmem:[#allocation7 + $0x70] sm:$0xff]
        %v583 = vld [vmem:[#allocation7 + $0x78] sm:$0xff]
        %v584 = vld [vmem:[#allocation7 + $0x80] sm:$0xff]
        %v585 = vld [vmem:[#allocation7 + $0x88] sm:$0xff]
        %v586 = vld [vmem:[#allocation7 + $0x90] sm:$0xff]
        %v587 = vld [vmem:[#allocation7 + $0x98] sm:$0xff]
        %v588 = vld [vmem:[#allocation7 + $0xa0] sm:$0xff]
        %v589 = vld [vmem:[#allocation7 + $0xa8] sm:$0xff]
        %v590 = vld [vmem:[#allocation7 + $0xb0] sm:$0xff]
        %v591 = vld [vmem:[#allocation7 + $0xb8] sm:$0xff]
        %v592 = vld [vmem:[#allocation7 + $0xc0] sm:$0xff]
        %v593 = vld [vmem:[#allocation7 + $0xc8] sm:$0xff]
        %v594 = vld [vmem:[#allocation7 + $0xd0] sm:$0xff]
        %v595 = vld [vmem:[#allocation7 + $0xd8] sm:$0xff]
        %v596 = vld [vmem:[#allocation7 + $0xe0] sm:$0xff]
        %v597 = vld [vmem:[#allocation7 + $0xe8] sm:$0xff]
        %v598 = vld [vmem:[#allocation7 + $0xf0] sm:$0xff]
        %v599 = vld [vmem:[#allocation7 + $0xf8] sm:$0xff]
        %v600 = vld [vmem:[%s5] sm:$0x1]
        %v602 = vperm.slane %v600, 0
        %604 = vmatpush.msra.mxu0 %v583
        %605 = vmatpush.msra.mxu0 %v582
        %606 = vmatpush.msra.mxu0 %v581
        %607 = vmatpush.msra.mxu0 %v580
        %608 = vmatpush.msra.mxu0 %v579
        %609 = vmatpush.msra.mxu0 %v578
        %610 = vmatpush.msra.mxu0 %v577
        %611 = vmatpush.msra.mxu0 %v576
        %612 = vmatpush.msra.mxu0 %v575
        %613 = vmatpush.msra.mxu0 %v574
        %614 = vmatpush.msra.mxu0 %v573
        %615 = vmatpush.msra.mxu0 %v572
        %616 = vmatpush.msra.mxu0 %v571
        %617 = vmatpush.msra.mxu0 %v570
        %618 = vmatpush.msra.mxu0 %v569
        %619 = vmatpush.msra.mxu0 %v568
        %620 = vmatmul.f32.gmra.mxu0 %v560
        %v621 = vpop.f32.mrf.mxu0
        %v622 = vadd.f32 %v602, %v621
        %623 = vmatmul.f32.gmra.mxu0 %v562
        %v624 = vpop.f32.mrf.mxu0
        %v625 = vadd.f32 %v602, %v624
        %626 = vmatmul.f32.gmra.mxu0 %v564
        %v627 = vpop.f32.mrf.mxu0
        %v628 = vadd.f32 %v602, %v627
        %629 = vmatmul.f32.gmra.mxu0 %v566
        %v630 = vpop.f32.mrf.mxu0
        %v631 = vadd.f32 %v602, %v630
        %632 = vdwg.mxu0
        %633 = vmatpush.msra.mxu0 %v599
        %634 = vmatpush.msra.mxu0 %v598
        %635 = vmatpush.msra.mxu0 %v597
        %636 = vmatpush.msra.mxu0 %v596
        %637 = vmatpush.msra.mxu0 %v595
        %638 = vmatpush.msra.mxu0 %v594
        %639 = vmatpush.msra.mxu0 %v593
        %640 = vmatpush.msra.mxu0 %v592
        %641 = vmatpush.msra.mxu0 %v591
        %642 = vmatpush.msra.mxu0 %v590
        %643 = vmatpush.msra.mxu0 %v589
        %644 = vmatpush.msra.mxu0 %v588
        %645 = vmatpush.msra.mxu0 %v587
        %646 = vmatpush.msra.mxu0 %v586
        %647 = vmatpush.msra.mxu0 %v585
        %648 = vmatpush.msra.mxu0 %v584
        %649 = vmatmul.f32.gmra.mxu0 %v561
        %v650 = vpop.f32.mrf.mxu0
        %v651 = vadd.f32 %v622, %v650
        %652 = vmatmul.f32.gmra.mxu0 %v563
        %v653 = vpop.f32.mrf.mxu0
        %v654 = vadd.f32 %v625, %v653
        %655 = vmatmul.f32.gmra.mxu0 %v565
        %v656 = vpop.f32.mrf.mxu0
        %v657 = vadd.f32 %v628, %v656
        %658 = vmatmul.f32.gmra.mxu0 %v567
        %v659 = vpop.f32.mrf.mxu0
        %v660 = vadd.f32 %v631, %v659
        %661 = vdwg.mxu0
        %662 = vst [vmem:[%s291] sm:$0xff] %v651
        %663 = vst [vmem:[%s291 + $0x8] sm:$0xff] %v654
        %664 = vst [vmem:[%s291 + $0x10] sm:$0xff] %v657
        %665 = vst [vmem:[%s291 + $0x18] sm:$0xff] %v660
        %s666 = sand.u32 %s161, 1
        %s667 = scalar_lea.sflag [#allocation4], %s666
        %s668 = sand.u32 %s161, 1
        %s669 = smul.addr %s668, 32
        %s670 = scalar_lea.vmem [#allocation8], %s669
        // Predicated region
        $region57: #{tpu_custom_call.1} parent=43 // pred_check
          %p671 = pneg %p171
        $region58: #{tpu_custom_call.1} parent=43 // pred_check_branch
          %673 = sbr.rel (%p671) target = $region60
        $region59: #{tpu_custom_call.1} parent=43 // pred_region
          %s674 = smul.u32 4, %s22
          %676 = vsyncadd %s667, 0
          %s677 = smul.addr %s674, 8
          %s678 = scalar_lea.hbm %s6, %s677
          %s679 = sshll.u32 %s670, 4
          %s680 = int_to_ptr.vmem [resolvable:$true] %s679
          %s681 = sshll.u32 %s678, 4
          %s682 = int_to_ptr.hbm [resolvable:$true] %s681
          %687 = dma.vmem_to_hbm [thread:$0]  %s680, 512, %s682, %s667, 128, 128, 8
        $region60: #{tpu_custom_call.1} parent=43 // pred_fallthru
          _
      $region44: #{tpu_custom_call.1} parent=5 // pred_fallthru
        _
      %p688 = scmp.le.s32.totalorder 2, %s17
      // Predicated region
      $region61: #{tpu_custom_call.1} parent=5 // pred_check
        %p689 = pneg %p688
      $region62: #{tpu_custom_call.1} parent=5 // pred_check_branch
        %691 = sbr.rel (%p689) target = $region64
      $region63: #{tpu_custom_call.1} parent=5 // pred_region
        %s692 = ssub.s32 %s17, 2
        // Predicated region
        $region65: #{tpu_custom_call.1} parent=63 // pred_check
          %p693 = pneg %p177
        $region66: #{tpu_custom_call.1} parent=63 // pred_check_branch
          %695 = sbr.rel (%p693) target = $region68
        $region67: #{tpu_custom_call.1} parent=63 // pred_region
          %s696 = sand.u32 %s162, 1
          %s697 = scalar_lea.sflag [#allocation4], %s696
          %s698 = sand.u32 %s162, 1
          %s699 = smul.addr %s698, 32
          %s700 = scalar_lea.vmem [#allocation8], %s699
          %702 = dma.done %s697, 512
        $region68: #{tpu_custom_call.1} parent=63 // pred_fallthru
          _
      $region64: #{tpu_custom_call.1} parent=5 // pred_fallthru
        _
    $region6: #{tpu_custom_call.1} parent=1 // loop_footer
      %s21 = sadd.s32 1, %s17
    $region7: #{tpu_custom_call.1} parent=1 // loop_footer_branch
      %16 = sbr.rel target = $region3
    $region8: #{tpu_custom_call.1} parent=1 // loop_exit
      _
    %703 = vsyncpa [#allocation3], 1
    %s704 = scalar_lea.sflag [#allocation3], 1
    %705 = vsyncpa %s704, 1
    %706 = vsyncpa [#allocation6], 1
    %707 = vsyncpa [#allocation4], 1
    %s708 = scalar_lea.sflag [#allocation4], 1
    %709 = vsyncpa %s708, 1

</llo_original>
